<compile_context>
chip_gen: v7x
topology: tpu7x:2x2x1
jax: 0.10.0
libtpu: 0.0.40
codegen_flags: <defaults>
</compile_context>

<pallas_src>
import math

import jax
import jax.numpy as jnp
import numpy as np
from jax.experimental import pallas as pl
from jax.experimental.pallas import tpu as pltpu


# ----------------------------- Pallas kernel --------------------------------
def _stft_kernel(frames_ref, rhs_ref, out_ref):
    # frames_ref: (tile_m, W_pad)   rhs_ref: (W_pad, K2_pad)   out_ref: (tile_m, K2_pad)
    out_ref[...] = jnp.dot(
        frames_ref[...], rhs_ref[...], preferred_element_type=jnp.float32
    )


# ------------------------------- helpers -------------------------------------
def _round_up(x, m):
    return ((x + m - 1) // m) * m


def _choose_tiling(M, w_pad, k2_pad, in_bytes):
    """Pick the row tile so that (a) double-buffered VMEM stays well under the
    32 MiB default scoped limit (v7x-safe), and (b) the grid has >= 2 steps
    whenever M allows (v7x megacore)."""
    M_r = _round_up(max(M, 1), 8)
    if M_r <= 128:
        return M_r, M_r                           # single small tile; grid = 1
    M_pad = _round_up(M_r, 128)                   # 128-aligned rows -> dense layout
    budget = 24 << 20                             # headroom under 32 MiB scoped VMEM
    tile_m = 512
    while tile_m > 128:
        vmem = (2 * tile_m * (w_pad * in_bytes + k2_pad * 4)   # frames + f32 out (x2 buf)
                + 2 * w_pad * k2_pad * in_bytes)               # resident DFT rhs
        if vmem <= budget:
            break
        tile_m //= 2
    # keep at least two grid steps so both v7x TensorCores get work
    if M_pad // tile_m < 2:
        tile_m = max(128, ((M_pad // 2) // 128) * 128)
    M_pad = _round_up(M_pad, tile_m)
    return tile_m, M_pad


# ------------------------------- wrapper --------------------------------------
def learnable_stft(signal, window, dft_cos, dft_sin, window_size, hop_size,
                   dft_size, *, use_bf16=False):
    if signal.ndim == 1:
        signal = signal[None, :]
    B, N = signal.shape

    # --- framing (matches torch .unfold + the pad-and-refold branch) ---
    num_frames_unfolded = (N - window_size) // hop_size + 1
    F = int(math.ceil((N - window_size) / hop_size)) + 1
    if num_frames_unfolded < F:
        pad = (F - 1) * hop_size + window_size - N
        signal = jnp.pad(signal, ((0, 0), (0, pad)))
    # TODO(synk): for hop_size << window_size on HBM-bound shapes (esp. v5e), frame
    # in-kernel via manual DMA over the raw signal instead of materializing frames.
    idx = jnp.arange(F)[:, None] * hop_size + jnp.arange(window_size)[None, :]
    frames = signal[:, idx]                                   # (B, F, W)
    M = B * F

    in_dtype = jnp.bfloat16 if use_bf16 else jnp.float32
    in_bytes = 2 if use_bf16 else 4

    # --- fold the window into the DFT matrices; fuse real+imag into one RHS ---
    wcol = window.astype(jnp.float32)[:, None]                # (W, 1)
    rhs = jnp.concatenate(
        [wcol * dft_cos.T.astype(jnp.float32),                # (W, K) real
         wcol * dft_sin.T.astype(jnp.float32)],               # (W, K) imag
        axis=1,
    )                                                         # (W, 2K)

    # --- pad W (contraction) and 2K (output lanes) to multiples of 128 ---
    W_pad = _round_up(window_size, 128)
    K2 = 2 * dft_size
    K2_pad = _round_up(K2, 128)
    rhs = jnp.pad(rhs, ((0, W_pad - window_size), (0, K2_pad - K2))).astype(in_dtype)

    frames2d = frames.reshape(M, window_size).astype(in_dtype)
    tile_m, M_pad = _choose_tiling(M, W_pad, K2_pad, in_bytes)
    frames2d = jnp.pad(frames2d, ((0, M_pad - M), (0, W_pad - window_size)))

    grid = (M_pad // tile_m,)
    cost = pl.CostEstimate(
        flops=2 * M_pad * W_pad * K2_pad,
        transcendentals=0,
        bytes_accessed=(M_pad * W_pad * in_bytes
                        + W_pad * K2_pad * in_bytes
                        + M_pad * K2_pad * 4),
    )

    out = pl.pallas_call(
        _stft_kernel,
        out_shape=jax.ShapeDtypeStruct((M_pad, K2_pad), jnp.float32),
        grid_spec=pltpu.PrefetchScalarGridSpec(
            num_scalar_prefetch=0,
            grid=grid,
            in_specs=[
                pl.BlockSpec((tile_m, W_pad), lambda i: (i, 0)),
                pl.BlockSpec((W_pad, K2_pad), lambda i: (0, 0)),  # grid-invariant RHS
            ],
            out_specs=pl.BlockSpec((tile_m, K2_pad), lambda i: (i, 0)),
        ),
        compiler_params=pltpu.CompilerParams(dimension_semantics=("parallel",)),
        cost_estimate=cost,
    )(frames2d, rhs)

    real = out[:M, :dft_size]
    imag = out[:M, dft_size:K2]
    return jax.lax.complex(real, imag).reshape(B, F, dft_size)   # complex64 (B, F, K)


# -------------------------- deterministic parameters --------------------------
def make_params(window_size, dft_size):
    n = jnp.arange(window_size, dtype=jnp.float32)
    window = 0.54 - 0.46 * jnp.cos(2.0 * math.pi * n / (window_size - 1))
    k = jnp.arange(dft_size, dtype=jnp.float32)[:, None]
    nn_ = jnp.arange(window_size, dtype=jnp.float32)[None, :]
    angle = -2.0 * math.pi * k * nn_ / dft_size
    dft_cos = jnp.cos(angle)   # (K, W) real part of dft_matrix
    dft_sin = jnp.sin(angle)   # (K, W) imag part of dft_matrix
    return window, dft_cos, dft_sin


# -------------------------------- reference -----------------------------------
def reference_stft(signal, window, dft_cos, dft_sin, window_size, hop_size, dft_size):
    if signal.ndim == 1:
        signal = signal[None, :]
    B, N = signal.shape
    num_frames_unfolded = (N - window_size) // hop_size + 1
    expected = int(math.ceil((N - window_size) / hop_size)) + 1
    if num_frames_unfolded < expected:
        pad = (expected - 1) * hop_size + window_size - N
        signal = jnp.pad(signal, ((0, 0), (0, pad)))
    idx = jnp.arange(expected)[:, None] * hop_size + jnp.arange(window_size)[None, :]
    frames = signal[:, idx] * window                         # (B, F, W)
    dft = jax.lax.complex(dft_cos, dft_sin)                  # (K, W)
    x = frames.reshape(B * expected, window_size)
    out = (dft @ x.T.astype(dft.dtype)).T.reshape(B, expected, dft_size)
    return out


def _check(window_size, hop_size, dft_size, B, N, use_bf16, atol, rtol, seed=0):
    key = jax.random.PRNGKey(seed)
    signal = jax.random.normal(key, (B, N), dtype=jnp.float32)
    window, dft_cos, dft_sin = make_params(window_size, dft_size)
    out = learnable_stft(signal, window, dft_cos, dft_sin,
                         window_size, hop_size, dft_size, use_bf16=use_bf16)
    out = jax.block_until_ready(out)
    ref = reference_stft(signal, window, dft_cos, dft_sin,
                         window_size, hop_size, dft_size)
    assert out.shape == ref.shape and out.dtype == jnp.complex64
    assert np.allclose(np.asarray(out), np.asarray(ref), atol=atol, rtol=rtol)


if __name__ == "__main__":
    # 1) small config exercising the pad-and-refold branch, full f32 accuracy.
    _check(window_size=16, hop_size=8, dft_size=16, B=2, N=70,
           use_bf16=False, atol=1e-3, rtol=1e-3)
    # 2) same config with bf16 inputs / f32 accumulation (MXU-peak path);
    #    bf16 input rounding needs a looser tolerance.
    _check(window_size=16, hop_size=8, dft_size=16, B=2, N=70,
           use_bf16=True, atol=5e-2, rtol=5e-2)
    # 3) larger M so the kernel runs a multi-step parallel grid (>=2 tiles),
    #    with dft_size != window_size.
    _check(window_size=32, hop_size=16, dft_size=48, B=2, N=2050,
           use_bf16=False, atol=1e-3, rtol=1e-3)
    print("KERNEL_OK")
</pallas_src>

<mosaic_0001>
module attributes {stable_mosaic.version = 11 : i64} {
  func.func @_stft_kernel(%arg0: i32, %arg1: memref<16x128xf32, #tpu.memory_space<vmem>>, %arg2: memref<128x128xf32, #tpu.memory_space<vmem>>, %arg3: memref<16x128xf32, #tpu.memory_space<vmem>>) attributes {dimension_semantics = [#tpu.dimension_semantics<parallel>], iteration_bounds = array<i64: 1>, scalar_prefetch = 0 : i64, scratch_operands = 0 : i64, tpu.core_type = #tpu.core_type<tc>, window_params = [{transform_indices = @transform_0, window_bounds = array<i64: 16, 128>}, {pipeline_mode = #tpu.pipeline_mode<synchronous>, transform_indices = @transform_1, window_bounds = array<i64: 128, 128>}, {transform_indices = @transform_2, window_bounds = array<i64: 16, 128>}]} {
    %c0 = arith.constant 0 : index
    %c0_0 = arith.constant 0 : index
    %0 = vector.load %arg1[%c0, %c0_0] : memref<16x128xf32, #tpu.memory_space<vmem>>, vector<16x128xf32>
    %c0_1 = arith.constant 0 : index
    %c0_2 = arith.constant 0 : index
    %1 = vector.load %arg2[%c0_1, %c0_2] : memref<128x128xf32, #tpu.memory_space<vmem>>, vector<128x128xf32>
    %cst = arith.constant dense<0.000000e+00> : vector<16x128xf32>
    %2 = tpu.matmul %0, %1, %cst {dimension_numbers = #tpu.dot_dimension_numbers<[1], [0], [0], [1], [0, 0, 1, 1], [], []>} : vector<16x128xf32>, vector<128x128xf32>, vector<16x128xf32> -> vector<16x128xf32>
    %c0_3 = arith.constant 0 : index
    %c0_4 = arith.constant 0 : index
    %3 = vector.load %arg3[%c0_3, %c0_4] : memref<16x128xf32, #tpu.memory_space<vmem>>, vector<16x128xf32>
    tpu.vector_store %arg3[%c0_3, %c0_4], %2 {strides = array<i32>} : memref<16x128xf32, #tpu.memory_space<vmem>>, vector<16x128xf32>,
    return
  }
  func.func @transform_0(%arg0: i32) -> (i32, i32) {
    %c0_i32 = arith.constant 0 : i32
    %c0_i32_0 = arith.constant 0 : i32
    return %arg0, %c0_i32 : i32, i32
  }
  func.func @transform_1(%arg0: i32) -> (i32, i32) {
    %c0_i32 = arith.constant 0 : i32
    %c0_i32_0 = arith.constant 0 : i32
    %c0_i32_1 = arith.constant 0 : i32
    return %c0_i32, %c0_i32_0 : i32, i32
  }
  func.func @transform_2(%arg0: i32) -> (i32, i32) {
    %c0_i32 = arith.constant 0 : i32
    %c0_i32_0 = arith.constant 0 : i32
    return %arg0, %c0_i32 : i32, i32
  }
}

</mosaic_0001>

<llo_original>
// kernel: tpu_custom_call.1
$region0: #{tpu_custom_call.1}
  #allocation0 [shape = 'u32[]', space=smem, size = 0x4, offset = 0x4, fixed_abs, tag = 'smem constant byte address 0x4 - core index']
  #allocation1 [shape = 'u32[144,128]{1,0:T(1,128)}', space=vmem, size = 0x12000, scoped, tag = 'internal scratch']
  %s0 = inlined_call_operand.hbm [shape: f32[16,128], index: 0, kind: input, shape index: {}]
  %s1 = inlined_call_operand.hbm [shape: f32[128,128], index: 1, kind: input, shape index: {}]
  %s2 = inlined_call_operand.hbm [shape: f32[16,128], index: 2, kind: output, shape index: {}]
  %s3 = sld [smem:[#allocation0]]
  $region26: #{tpu_custom_call.1} parent=0
    _
  %s5 = ssub.s32 1, %s3
  %s6 = scalar_select 0, %s5, %s3
  $region1: #{tpu_custom_call.1} parent=0
    #allocation2 [shape = 'u8[8192]{0}', space=vmem, size = 0x2000, scoped, tag = 'input window, operand 0, single buffered']
    #allocation3 [shape = 's32[1]{0}', space=sflag, size = 0x4, scoped, tag = 'scoped memory for tpu_custom_call.1']
    #allocation4 [shape = 's32[1]{0}', space=sflag, size = 0x4, scoped, tag = 'scoped memory for tpu_custom_call.1']
    #allocation5 [shape = 'u8[65536]{0}', space=vmem, size = 0x10000, scoped, tag = 'input window, operand 1, single buffered']
    #allocation6 [shape = 's32[1]{0}', space=sflag, size = 0x4, scoped, tag = 'scoped memory for tpu_custom_call.1']
    #allocation7 [shape = 'u8[8192]{0}', space=vmem, size = 0x2000, scoped, tag = 'output window, operand 0, single buffered']
    %7 = vsyncpa [#allocation3], 0
    %8 = vsyncpa [#allocation6], 0
    %9 = vsyncpa [#allocation4], 0
    // Predicated region
    $region2: #{tpu_custom_call.1} parent=1 // pred_check
      _
    $region3: #{tpu_custom_call.1} parent=1 // pred_check_branch
      %11 = sbr.rel (0) target = $region5
    $region4: #{tpu_custom_call.1} parent=1 // pred_region
      %s13 = ssub.s32 256, 256
      %14 = vsyncadd [#allocation3], %s13
      %s15 = sshll.u32 [#allocation2], 4
      %s16 = int_to_ptr.vmem [resolvable:$true] %s15
      %21 = dma.hbm_to_vmem [thread:$0]  %s0, 256, %s16, [#allocation3], 128, 128, 8
    $region5: #{tpu_custom_call.1} parent=1 // pred_fallthru
      _
    // Predicated region
    $region6: #{tpu_custom_call.1} parent=1 // pred_check
      _
    $region7: #{tpu_custom_call.1} parent=1 // pred_check_branch
      %23 = sbr.rel (0) target = $region9
    $region8: #{tpu_custom_call.1} parent=1 // pred_region
      %s25 = ssub.s32 2048, 2048
      %26 = vsyncadd [#allocation6], %s25
      %s27 = sshll.u32 [#allocation5], 4
      %s28 = int_to_ptr.vmem [resolvable:$true] %s27
      %33 = dma.hbm_to_vmem [thread:$0]  %s1, 2048, %s28, [#allocation6], 128, 128, 8
    $region9: #{tpu_custom_call.1} parent=1 // pred_fallthru
      _
    // Predicated region
    $region10: #{tpu_custom_call.1} parent=1 // pred_check
      _
    $region11: #{tpu_custom_call.1} parent=1 // pred_check_branch
      %35 = sbr.rel (0) target = $region13
    $region12: #{tpu_custom_call.1} parent=1 // pred_region
      %36 = dma.done [#allocation3], 256
    $region13: #{tpu_custom_call.1} parent=1 // pred_fallthru
      _
    // Predicated region
    $region14: #{tpu_custom_call.1} parent=1 // pred_check
      _
    $region15: #{tpu_custom_call.1} parent=1 // pred_check_branch
      %38 = sbr.rel (0) target = $region17
    $region16: #{tpu_custom_call.1} parent=1 // pred_region
      %39 = dma.done [#allocation6], 2048
    $region17: #{tpu_custom_call.1} parent=1 // pred_fallthru
      _
    %v40 = vld [vmem:[#allocation2] sm:$0xff]
    %v41 = vld [vmem:[#allocation2 + $0x8] sm:$0xff]
    %v42 = vld [vmem:[#allocation5] sm:$0xff]
    %v43 = vld [vmem:[#allocation5 + $0x8] sm:$0xff]
    %v44 = vld [vmem:[#allocation5 + $0x10] sm:$0xff]
    %v45 = vld [vmem:[#allocation5 + $0x18] sm:$0xff]
    %v46 = vld [vmem:[#allocation5 + $0x20] sm:$0xff]
    %v47 = vld [vmem:[#allocation5 + $0x28] sm:$0xff]
    %v48 = vld [vmem:[#allocation5 + $0x30] sm:$0xff]
    %v49 = vld [vmem:[#allocation5 + $0x38] sm:$0xff]
    %v50 = vld [vmem:[#allocation5 + $0x40] sm:$0xff]
    %v51 = vld [vmem:[#allocation5 + $0x48] sm:$0xff]
    %v52 = vld [vmem:[#allocation5 + $0x50] sm:$0xff]
    %v53 = vld [vmem:[#allocation5 + $0x58] sm:$0xff]
    %v54 = vld [vmem:[#allocation5 + $0x60] sm:$0xff]
    %v55 = vld [vmem:[#allocation5 + $0x68] sm:$0xff]
    %v56 = vld [vmem:[#allocation5 + $0x70] sm:$0xff]
    %v57 = vld [vmem:[#allocation5 + $0x78] sm:$0xff]
    %58 = vmatprep.subr.mxu0 0.0
    %59 = vmatpush1.msra.mxu0 %v42
    %60 = vmatprep.subr.mxu0 0.0
    %61 = vmatpush1.msra.mxu0 %v43
    %62 = vmatprep.subr.mxu0 0.0
    %63 = vmatpush1.msra.mxu0 %v44
    %64 = vmatprep.subr.mxu0 0.0
    %65 = vmatpush1.msra.mxu0 %v45
    %66 = vmatprep.subr.mxu0 0.0
    %67 = vmatpush1.msra.mxu0 %v46
    %68 = vmatprep.subr.mxu0 0.0
    %69 = vmatpush1.msra.mxu0 %v47
    %70 = vmatprep.subr.mxu0 0.0
    %71 = vmatpush1.msra.mxu0 %v48
    %72 = vmatprep.subr.mxu0 0.0
    %73 = vmatpush1.msra.mxu0 %v49
    %74 = vmatprep.subr.mxu0 0.0
    %75 = vmatpush1.msra.mxu0 %v50
    %76 = vmatprep.subr.mxu0 0.0
    %77 = vmatpush1.msra.mxu0 %v51
    %78 = vmatprep.subr.mxu0 0.0
    %79 = vmatpush1.msra.mxu0 %v52
    %80 = vmatprep.subr.mxu0 0.0
    %81 = vmatpush1.msra.mxu0 %v53
    %82 = vmatprep.subr.mxu0 0.0
    %83 = vmatpush1.msra.mxu0 %v54
    %84 = vmatprep.subr.mxu0 0.0
    %85 = vmatpush1.msra.mxu0 %v55
    %86 = vmatprep.subr.mxu0 0.0
    %87 = vmatpush1.msra.mxu0 %v56
    %88 = vmatprep.subr.mxu0 0.0
    %89 = vmatpush1.msra.mxu0 %v57
    %90 = vmatprep.subr.mxu0 0.0
    %91 = vmatpush1.msra.mxu0 0.0
    %92 = vmatprep.subr.mxu0 0.0
    %93 = vmatpush1.msra.mxu0 0.0
    %94 = vmatprep.subr.mxu0 0.0
    %95 = vmatpush1.msra.mxu0 0.0
    %96 = vmatprep.subr.mxu0 0.0
    %97 = vmatpush1.msra.mxu0 0.0
    %98 = vmatprep.subr.mxu0 0.0
    %99 = vmatpush1.msra.mxu0 0.0
    %100 = vmatprep.subr.mxu0 0.0
    %101 = vmatpush1.msra.mxu0 0.0
    %102 = vmatprep.subr.mxu0 0.0
    %103 = vmatpush1.msra.mxu0 0.0
    %104 = vmatprep.subr.mxu0 0.0
    %105 = vmatpush1.msra.mxu0 0.0
    %106 = vmatprep.subr.mxu0 0.0
    %107 = vmatpush1.msra.mxu0 0.0
    %108 = vmatprep.subr.mxu0 0.0
    %109 = vmatpush1.msra.mxu0 0.0
    %110 = vmatprep.subr.mxu0 0.0
    %111 = vmatpush1.msra.mxu0 0.0
    %112 = vmatprep.subr.mxu0 0.0
    %113 = vmatpush1.msra.mxu0 0.0
    %114 = vmatprep.subr.mxu0 0.0
    %115 = vmatpush1.msra.mxu0 0.0
    %116 = vmatprep.subr.mxu0 0.0
    %117 = vmatpush1.msra.mxu0 0.0
    %118 = vmatprep.subr.mxu0 0.0
    %119 = vmatpush1.msra.mxu0 0.0
    %120 = vmatprep.subr.mxu0 0.0
    %121 = vmatpush1.msra.mxu0 0.0
    %122 = vmatprep.mubr.f32.mxu0 0.0
    %123 = vmatmul.mubr.f32.gmra.mrb[0].mxu0 %v40
    %v124 = vpop.f32.mrb[0].mxu0
    %v125 = vadd.f32 0.0, %v124
    %v126 = vpop.f32.mrb[0].mxu0
    %127 = vmatprep.mubr.f32.mxu0 0.0
    %128 = vmatmul.mubr.f32.gmra.mrb[0].mxu0 %v41
    %v129 = vpop.f32.mrb[0].mxu0
    %v130 = vadd.f32 0.0, %v129
    %v131 = vpop.f32.mrb[0].mxu0
    %132 = vdwg.mxu0
    %133 = vst [vmem:[#allocation7] sm:$0xff] %v125
    %134 = vst [vmem:[#allocation7 + $0x8] sm:$0xff] %v130
    // Predicated region
    $region18: #{tpu_custom_call.1} parent=1 // pred_check
      _
    $region19: #{tpu_custom_call.1} parent=1 // pred_check_branch
      %136 = sbr.rel (0) target = $region21
    $region20: #{tpu_custom_call.1} parent=1 // pred_region
      %s138 = ssub.s32 256, 256
      %139 = vsyncadd [#allocation4], %s138
      %s140 = sshll.u32 [#allocation7], 4
      %s141 = int_to_ptr.vmem [resolvable:$true] %s140
      %146 = dma.vmem_to_hbm [thread:$0]  %s141, 256, %s2, [#allocation4], 128, 128, 8
    $region21: #{tpu_custom_call.1} parent=1 // pred_fallthru
      _
    // Predicated region
    $region22: #{tpu_custom_call.1} parent=1 // pred_check
      _
    $region23: #{tpu_custom_call.1} parent=1 // pred_check_branch
      %148 = sbr.rel (0) target = $region25
    $region24: #{tpu_custom_call.1} parent=1 // pred_region
      %149 = dma.done [#allocation4], 256
    $region25: #{tpu_custom_call.1} parent=1 // pred_fallthru
      _
    %150 = vsyncpa [#allocation3], 1
    %151 = vsyncpa [#allocation6], 1
    %152 = vsyncpa [#allocation4], 1

</llo_original>
